<compile_context>
chip_gen: v7x
topology: tpu7x:2x2x1
jax: 0.10.0
libtpu: 0.0.40
codegen_flags: <defaults>
</compile_context>

<pallas_src>
import functools

import jax
import jax.numpy as jnp
from jax.experimental import pallas as pl
from jax.experimental.pallas import tpu as pltpu

LANE = 128


def _rmsnorm_kernel(x_ref, w_ref, o_ref, *, eps, inv_hidden, exact):
    # x_ref: (row_tile, hidden_pad), w_ref: (1, hidden_pad), o_ref: same as x block.
    # NOTE(correctness): with a ragged last row-block the padded rows contain
    # unspecified data; that is benign because rows are independent and
    # out-of-bounds rows are never written back. Do NOT add cross-row
    # reductions here without revisiting this.
    x = x_ref[...].astype(jnp.float32)
    # sum * (1/true_hidden) instead of mean so zero-padded lanes (hidden padded
    # up to a multiple of 128 in the wrapper) do not perturb the statistic.
    ms = jnp.sum(x * x, axis=-1, keepdims=True) * inv_hidden
    norm = x * jax.lax.rsqrt(ms + eps)
    if exact:
        # torch-exact: norm_x.type_as(x) * weight (intermediate downcast kept
        # on purpose for parity; a no-op for f32 inputs).
        o_ref[...] = (norm.astype(x_ref.dtype) * w_ref[...]).astype(o_ref.dtype)
    else:
        # fast path: skip the low-precision round trip before the weight mul
        # (saves ~2 VALU ops/elem; only relevant on v7x at full HBM rate).
        o_ref[...] = (norm * w_ref[...].astype(jnp.float32)).astype(o_ref.dtype)


def _sublane_multiple(dtype) -> int:
    # f32 -> 8, bf16/f16 -> 16, int8/fp8 -> 32 (packed sublane tile height)
    return max(8, 32 // jnp.dtype(dtype).itemsize)


def _tpu_generation_info():
    """Return (vmem_capacity_bytes, tensorcores_per_device), conservatively."""
    vmem = None
    try:
        vmem = int(pltpu.get_tpu_info().vmem_capacity_bytes)
    except Exception:
        vmem = None
    kind = ""
    try:
        kind = jax.devices()[0].device_kind.lower()
    except Exception:
        kind = ""
    if vmem is None:
        # v7x has 64 MiB VMEM per TensorCore; v5e/v6e have 128 MiB. If we can't
        # tell, assume the smaller figure so we never overcommit.
        if "v7" in kind:
            vmem = 64 << 20
        elif kind:
            vmem = 128 << 20
        else:
            vmem = 64 << 20
    # chips exposing 2 TensorCores behind one device (megacore): v4 / v5p / v7x
    cores = 2 if any(t in kind for t in ("v7", "v5p", "v4")) else 1
    return vmem, cores


def _adjust_for_megacore(rows, mult, row_tile):
    """On 2-TC parts, prefer an even grid-step count with >=2 steps per core
    (i.e. >=4 total) so both TensorCores are balanced and each core's pipeline
    has >=2 steps to double-buffer across. Never grows the tile past the
    VMEM-budget-derived `row_tile`."""
    rows_rounded = pl.cdiv(rows, mult) * mult
    max_steps = rows_rounded // mult
    if max_steps < 4:
        return row_tile  # too few sublane-tiles to split 4 ways
    steps = pl.cdiv(rows, row_tile)
    if steps >= 4 and steps % 2 == 0:
        return row_tile
    start = max(4, steps + (steps % 2))  # smallest even target >= current steps
    for target in range(start, min(max_steps, start + 64) + 1, 2):
        cand = max(mult, pl.cdiv(pl.cdiv(rows, target), mult) * mult)
        if cand <= row_tile and pl.cdiv(rows, cand) == target:
            return cand
    return row_tile


def _choose_row_tile(rows, hidden_pad, in_dtype, out_dtype, vmem_budget, num_cores):
    """Pick a row tile: big enough to amortize the ~0.35us/step pipeline
    overhead, small enough that double-buffered I/O tiles PLUS the f32
    elementwise temporaries fit the per-generation VMEM budget."""
    mult = max(_sublane_multiple(in_dtype), _sublane_multiple(out_dtype))
    in_b = jnp.dtype(in_dtype).itemsize
    out_b = jnp.dtype(out_dtype).itemsize
    # per-row VMEM footprint:
    #   2 * in_b   double-buffered input tile
    #   2 * out_b  double-buffered output tile
    #   ~12 B      f32 temporaries Mosaic materializes (upcast x, norm, product)
    per_row = hidden_pad * (2 * in_b + 2 * out_b + 12)
    row_tile = max(mult, (vmem_budget // per_row) // mult * mult)
    row_tile = min(row_tile, 2048)  # diminishing returns past ~1-2K rows
    rows_rounded = pl.cdiv(rows, mult) * mult
    row_tile = min(row_tile, rows_rounded)
    if num_cores >= 2:
        row_tile = _adjust_for_megacore(rows, mult, row_tile)
    # single-TC chips: a 1-step grid is fine; no artificial split.
    return row_tile


def rmsnorm(x, weight, eps=1e-6, *, row_tile=None, out_dtype=None, exact=True):
    """RMSNorm over the last axis of x, scaled by `weight` (shape (hidden,)).

    out_dtype=None keeps torch parity (promote(x.dtype, weight.dtype)); pass
    e.g. out_dtype=x.dtype for bf16 inputs to cut HBM write traffic ~33%.
    exact=True keeps the torch-exact norm.type_as(x) downcast before the
    weight multiply; exact=False computes everything in f32 with one final cast.
    """
    orig_shape = x.shape
    hidden = orig_shape[-1]
    rows = 1
    for d in orig_shape[:-1]:
        rows *= d

    if out_dtype is None:
        # torch promotion of (norm_x.type_as(x) * weight).
        out_dtype = jnp.promote_types(x.dtype, weight.dtype)

    x2d = x.reshape(rows, hidden)
    w2d = weight.reshape(1, hidden)

    # Lane-dense last dim: pad hidden up to a multiple of 128 so every store is
    # an unmasked vst. The kernel normalizes with 1/true_hidden, so zero
    # padding never changes the statistic; padded lanes are sliced off below.
    hidden_pad = pl.cdiv(hidden, LANE) * LANE
    if hidden_pad != hidden:
        x2d = jnp.pad(x2d, ((0, 0), (0, hidden_pad - hidden)))
        w2d = jnp.pad(w2d, ((0, 0), (0, hidden_pad - hidden)))

    vmem_capacity, num_cores = _tpu_generation_info()
    if vmem_capacity <= (64 << 20):
        # v7x-class: 64 MiB physical per TensorCore -> keep total well clear.
        vmem_budget = 28 << 20
        vmem_limit = 40 << 20
    else:
        # v5e/v6e-class: 128 MiB physical -> spend it on bigger tiles.
        vmem_budget = 56 << 20
        vmem_limit = 96 << 20

    if row_tile is None:
        row_tile = _choose_row_tile(rows, hidden_pad, x.dtype, out_dtype,
                                    vmem_budget, num_cores)

    grid = (pl.cdiv(rows, row_tile),)  # partial last block handled by masking

    # TODO(synk): for very small hidden / many-step shapes on v7x, sweeping
    # pipeline_mode=pl.Buffered(3) on the input spec may add a few %.
    out = pl.pallas_call(
        functools.partial(_rmsnorm_kernel, eps=eps, inv_hidden=1.0 / hidden,
                          exact=exact),
        out_shape=jax.ShapeDtypeStruct((rows, hidden_pad), out_dtype),
        grid_spec=pltpu.PrefetchScalarGridSpec(
            num_scalar_prefetch=0,
            grid=grid,
            in_specs=[
                pl.BlockSpec((row_tile, hidden_pad), lambda i: (i, 0)),
                # weight tile is constant across the grid; Pallas keeps it
                # resident in VMEM (no per-step re-DMA).
                pl.BlockSpec((1, hidden_pad), lambda i: (0, 0)),
            ],
            out_specs=pl.BlockSpec((row_tile, hidden_pad), lambda i: (i, 0)),
        ),
        compiler_params=pltpu.CompilerParams(
            dimension_semantics=("parallel",),
            vmem_limit_bytes=vmem_limit,
        ),
    )(x2d, w2d)

    if hidden_pad != hidden:
        out = out[:, :hidden]
    return out.reshape(orig_shape)


def rmsnorm_ref(x, weight, eps=1e-6):
    xf = x.astype(jnp.float32)
    norm = xf * jax.lax.rsqrt(jnp.mean(xf * xf, axis=-1, keepdims=True) + eps)
    return norm.astype(x.dtype) * weight


if __name__ == "__main__":
    key = jax.random.PRNGKey(0)

    # Main test: lane-dense hidden (multiple of 128)
    batch, seq, hidden = 2, 8, 128
    x = jax.random.normal(key, (batch, seq, hidden), dtype=jnp.float32)
    weight = jnp.ones((hidden,), dtype=jnp.float32)  # RMSNorm init: ones

    out = jax.block_until_ready(rmsnorm(x, weight, eps=1e-6))
    ref = rmsnorm_ref(x, weight, eps=1e-6)
    assert out.shape == x.shape, (out.shape, x.shape)
    assert out.dtype == ref.dtype, (out.dtype, ref.dtype)
    assert jnp.allclose(out, ref, atol=1e-5, rtol=1e-5), "mismatch vs reference"

    # Ragged-rows test: batch*seq not a multiple of the row tile (exercises the
    # cdiv grid + masked partial last row-block path).
    x2 = jax.random.normal(jax.random.PRNGKey(1), (3, 5, hidden), dtype=jnp.float32)
    out2 = jax.block_until_ready(rmsnorm(x2, weight, eps=1e-6))
    ref2 = rmsnorm_ref(x2, weight, eps=1e-6)
    assert out2.shape == x2.shape, (out2.shape, x2.shape)
    assert jnp.allclose(out2, ref2, atol=1e-5, rtol=1e-5), "ragged mismatch"

    # Non-lane-dense hidden test: exercises the pad-to-128 + slice-back path.
    h3 = 32
    x3 = jax.random.normal(jax.random.PRNGKey(2), (2, 8, h3), dtype=jnp.float32)
    w3 = jax.random.normal(jax.random.PRNGKey(3), (h3,), dtype=jnp.float32)
    out3 = jax.block_until_ready(rmsnorm(x3, w3, eps=1e-6))
    ref3 = rmsnorm_ref(x3, w3, eps=1e-6)
    assert out3.shape == x3.shape, (out3.shape, x3.shape)
    assert jnp.allclose(out3, ref3, atol=1e-5, rtol=1e-5), "padded-hidden mismatch"

    # bf16 x + f32 weight: torch-promoted f32 output by default.
    x4 = jax.random.normal(jax.random.PRNGKey(4), (2, 8, hidden), dtype=jnp.bfloat16)
    out4 = jax.block_until_ready(rmsnorm(x4, weight, eps=1e-6))
    ref4 = rmsnorm_ref(x4, weight, eps=1e-6)
    assert out4.dtype == ref4.dtype, (out4.dtype, ref4.dtype)
    assert jnp.allclose(out4, ref4, atol=1e-2, rtol=1e-2), "bf16 mismatch"

    print("KERNEL_OK")
</pallas_src>

<mosaic_0001>
module attributes {stable_mosaic.version = 11 : i64} {
  func.func @_rmsnorm_kernel(%arg0: i32, %arg1: memref<16x128xf32, #tpu.memory_space<vmem>>, %arg2: memref<1x128xf32, #tpu.memory_space<vmem>>, %arg3: memref<16x128xf32, #tpu.memory_space<vmem>>) attributes {dimension_semantics = [#tpu.dimension_semantics<parallel>], iteration_bounds = array<i64: 1>, scalar_prefetch = 0 : i64, scratch_operands = 0 : i64, tpu.core_type = #tpu.core_type<tc>, window_params = [{transform_indices = @transform_0, window_bounds = array<i64: 16, 128>}, {pipeline_mode = #tpu.pipeline_mode<synchronous>, transform_indices = @transform_1, window_bounds = array<i64: 1, 128>}, {transform_indices = @transform_2, window_bounds = array<i64: 16, 128>}]} {
    %c0 = arith.constant 0 : index
    %c0_0 = arith.constant 0 : index
    %0 = vector.load %arg1[%c0, %c0_0] : memref<16x128xf32, #tpu.memory_space<vmem>>, vector<16x128xf32>
    %1 = arith.mulf %0, %0 : vector<16x128xf32>
    %cst = arith.constant dense<0.000000e+00> : vector<16xf32>
    %2 = vector.multi_reduction <add>, %1, %cst [1] : vector<16x128xf32> to vector<16xf32>
    %3 = vector.shape_cast %2 : vector<16xf32> to vector<16x1xf32>
    %cst_1 = arith.constant 7.812500e-03 : f32
    %4 = vector.broadcast %cst_1 : f32 to vector<16x1xf32>
    %5 = arith.mulf %3, %4 : vector<16x1xf32>
    %cst_2 = arith.constant 9.99999997E-7 : f32
    %6 = vector.broadcast %cst_2 : f32 to vector<16x1xf32>
    %7 = arith.addf %5, %6 : vector<16x1xf32>
    %8 = math.rsqrt %7 : vector<16x1xf32>
    %9 = vector.broadcast %8 : vector<16x1xf32> to vector<16x128xf32>
    %10 = arith.mulf %0, %9 : vector<16x128xf32>
    %c0_3 = arith.constant 0 : index
    %c0_4 = arith.constant 0 : index
    %11 = vector.load %arg2[%c0_3, %c0_4] : memref<1x128xf32, #tpu.memory_space<vmem>>, vector<1x128xf32>
    %12 = vector.broadcast %11 : vector<1x128xf32> to vector<16x128xf32>
    %13 = arith.mulf %10, %12 : vector<16x128xf32>
    %c0_5 = arith.constant 0 : index
    %c0_6 = arith.constant 0 : index
    %14 = vector.load %arg3[%c0_5, %c0_6] : memref<16x128xf32, #tpu.memory_space<vmem>>, vector<16x128xf32>
    tpu.vector_store %arg3[%c0_5, %c0_6], %13 {strides = array<i32>} : memref<16x128xf32, #tpu.memory_space<vmem>>, vector<16x128xf32>,
    return
  }
  func.func @transform_0(%arg0: i32) -> (i32, i32) {
    %c0_i32 = arith.constant 0 : i32
    %c0_i32_0 = arith.constant 0 : i32
    return %arg0, %c0_i32 : i32, i32
  }
  func.func @transform_1(%arg0: i32) -> (i32, i32) {
    %c0_i32 = arith.constant 0 : i32
    %c0_i32_0 = arith.constant 0 : i32
    %c0_i32_1 = arith.constant 0 : i32
    return %c0_i32, %c0_i32_0 : i32, i32
  }
  func.func @transform_2(%arg0: i32) -> (i32, i32) {
    %c0_i32 = arith.constant 0 : i32
    %c0_i32_0 = arith.constant 0 : i32
    return %arg0, %c0_i32 : i32, i32
  }
}

</mosaic_0001>

<llo_original>
// kernel: tpu_custom_call.1
$region0: #{tpu_custom_call.1}
  #allocation0 [shape = 'u32[]', space=smem, size = 0x4, offset = 0x4, fixed_abs, tag = 'smem constant byte address 0x4 - core index']
  #allocation1 [shape = 'u32[144,128]{1,0:T(1,128)}', space=vmem, size = 0x12000, scoped, tag = 'internal scratch']
  %s0 = inlined_call_operand.hbm [shape: f32[16,128], index: 0, kind: input, shape index: {}]
  %s1 = inlined_call_operand.hbm [shape: f32[1,128], index: 1, kind: input, shape index: {}]
  %s2 = inlined_call_operand.hbm [shape: f32[16,128], index: 2, kind: output, shape index: {}]
  %s3 = sld [smem:[#allocation0]]
  $region26: #{tpu_custom_call.1} parent=0
    _
  %s5 = ssub.s32 1, %s3
  %s6 = scalar_select 0, %s5, %s3
  $region1: #{tpu_custom_call.1} parent=0
    #allocation2 [shape = 'u8[8192]{0}', space=vmem, size = 0x2000, scoped, tag = 'input window, operand 0, single buffered']
    #allocation3 [shape = 's32[1]{0}', space=sflag, size = 0x4, scoped, tag = 'scoped memory for tpu_custom_call.1']
    #allocation4 [shape = 's32[1]{0}', space=sflag, size = 0x4, scoped, tag = 'scoped memory for tpu_custom_call.1']
    #allocation5 [shape = 'u8[512]{0}', space=vmem, size = 0x400, scoped, tag = 'input window, operand 1, single buffered']
    #allocation6 [shape = 's32[1]{0}', space=sflag, size = 0x4, scoped, tag = 'scoped memory for tpu_custom_call.1']
    #allocation7 [shape = 'u8[8192]{0}', space=vmem, size = 0x2000, scoped, tag = 'output window, operand 0, single buffered']
    %7 = vsyncpa [#allocation3], 0
    %8 = vsyncpa [#allocation6], 0
    %9 = vsyncpa [#allocation4], 0
    // Predicated region
    $region2: #{tpu_custom_call.1} parent=1 // pred_check
      _
    $region3: #{tpu_custom_call.1} parent=1 // pred_check_branch
      %11 = sbr.rel (0) target = $region5
    $region4: #{tpu_custom_call.1} parent=1 // pred_region
      %s13 = ssub.s32 256, 256
      %14 = vsyncadd [#allocation3], %s13
      %s15 = sshll.u32 [#allocation2], 4
      %s16 = int_to_ptr.vmem [resolvable:$true] %s15
      %21 = dma.hbm_to_vmem [thread:$0]  %s0, 256, %s16, [#allocation3], 128, 128, 8
    $region5: #{tpu_custom_call.1} parent=1 // pred_fallthru
      _
    // Predicated region
    $region6: #{tpu_custom_call.1} parent=1 // pred_check
      _
    $region7: #{tpu_custom_call.1} parent=1 // pred_check_branch
      %23 = sbr.rel (0) target = $region9
    $region8: #{tpu_custom_call.1} parent=1 // pred_region
      %s25 = ssub.s32 16, 16
      %26 = vsyncadd [#allocation6], %s25
      %s28 = sshll.u32 [#allocation5], 4
      %s29 = int_to_ptr.vmem [resolvable:$true] %s28
      %31 = dma.hbm_to_vmem [thread:$0]  %s1, 16, %s29, [#allocation6]
    $region9: #{tpu_custom_call.1} parent=1 // pred_fallthru
      _
    // Predicated region
    $region10: #{tpu_custom_call.1} parent=1 // pred_check
      _
    $region11: #{tpu_custom_call.1} parent=1 // pred_check_branch
      %33 = sbr.rel (0) target = $region13
    $region12: #{tpu_custom_call.1} parent=1 // pred_region
      %34 = dma.done [#allocation3], 256
    $region13: #{tpu_custom_call.1} parent=1 // pred_fallthru
      _
    // Predicated region
    $region14: #{tpu_custom_call.1} parent=1 // pred_check
      _
    $region15: #{tpu_custom_call.1} parent=1 // pred_check_branch
      %36 = sbr.rel (0) target = $region17
    $region16: #{tpu_custom_call.1} parent=1 // pred_region
      %37 = dma.done [#allocation6], 16
    $region17: #{tpu_custom_call.1} parent=1 // pred_fallthru
      _
    %v38 = vld [vmem:[#allocation2] sm:$0xff]
    %v39 = vld [vmem:[#allocation2 + $0x8] sm:$0xff]
    %v40 = vmul.f32 %v38, %v38
    %v41 = vmul.f32 %v39, %v39
    %42 = vadd.xlane.f32.xlu0 %v40
    %v43 = vpop.xlane.xlu0 %42
    %44 = vadd.xlane.f32.xlu0 %v41
    %v45 = vpop.xlane.xlu0 %44
    %v46 = vmul.f32 %v43, 0.0078125
    %v47 = vmul.f32 %v45, 0.0078125
    %v48 = vadd.f32 %v46, 1e-06
    %v49 = vadd.f32 %v47, 1e-06
    %v50 = vrsqrt.pop %v48
    %v51 = vrsqrt.pop %v49
    %v52 = vmul.f32 %v38, %v50
    %v53 = vmul.f32 %v39, %v51
    %v54 = vld [vmem:[#allocation5] sm:$0x1]
    %v56 = vlaneseq
    %v57 = vshrl.u32 %v56, 7
    %v58 = vsub.s32 0, %v57
    %v59 = vrot.slane %v54, %v58
    %v61 = vmul.f32 %v52, %v59
    %v62 = vmul.f32 %v53, %v59
    %63 = vst [vmem:[#allocation7] sm:$0xff] %v61
    %64 = vst [vmem:[#allocation7 + $0x8] sm:$0xff] %v62
    // Predicated region
    $region18: #{tpu_custom_call.1} parent=1 // pred_check
      _
    $region19: #{tpu_custom_call.1} parent=1 // pred_check_branch
      %66 = sbr.rel (0) target = $region21
    $region20: #{tpu_custom_call.1} parent=1 // pred_region
      %s68 = ssub.s32 256, 256
      %69 = vsyncadd [#allocation4], %s68
      %s70 = sshll.u32 [#allocation7], 4
      %s71 = int_to_ptr.vmem [resolvable:$true] %s70
      %76 = dma.vmem_to_hbm [thread:$0]  %s71, 256, %s2, [#allocation4], 128, 128, 8
    $region21: #{tpu_custom_call.1} parent=1 // pred_fallthru
      _
    // Predicated region
    $region22: #{tpu_custom_call.1} parent=1 // pred_check
      _
    $region23: #{tpu_custom_call.1} parent=1 // pred_check_branch
      %78 = sbr.rel (0) target = $region25
    $region24: #{tpu_custom_call.1} parent=1 // pred_region
      %79 = dma.done [#allocation4], 256
    $region25: #{tpu_custom_call.1} parent=1 // pred_fallthru
      _
    %80 = vsyncpa [#allocation3], 1
    %81 = vsyncpa [#allocation6], 1
    %82 = vsyncpa [#allocation4], 1

</llo_original>
